<compile_context>
chip_gen: v7x
topology: tpu7x:2x2x1
jax: 0.10.0
libtpu: 0.0.40
codegen_flags: <defaults>
</compile_context>

<pallas_src>
import functools

import jax
import jax.numpy as jnp
from jax.experimental import pallas as pl
from jax.experimental.pallas import tpu as pltpu


def _round_up(a: int, b: int) -> int:
    return ((a + b - 1) // b) * b


def _cdiv(a: int, b: int) -> int:
    return (a + b - 1) // b


def _vmem_capacity_bytes() -> int:
    # Per-generation physical VMEM (v5e/v6e: 128 MiB, v7x: 64 MiB/TC).
    try:
        info = pltpu.get_tpu_info()
        cap = int(getattr(info, "vmem_capacity_bytes", 0))
        if cap > 0:
            return cap
    except Exception:
        pass
    return 64 << 20  # conservative (v7x-sized) fallback


def _ls_ce_kernel(x_ref, t_ref, out_ref, *, smoothing: float, n_valid: int,
                  tile_n: int):
    i = pl.program_id(0)

    x = x_ref[...].astype(jnp.float32)            # (TILE_N, C) logits (one upcast)
    t = t_ref[...]                                # (TILE_N, 1) int32 targets
    tn, c = x.shape

    # Single shifted f32 tile reused for exp, row-sum and the target gather.
    m = jnp.max(x, axis=-1, keepdims=True)                        # (TILE_N, 1)
    xm = x - m                                                    # (TILE_N, C)

    # Numerically-stable pieces; the shift m cancels in the final loss:
    #   loss = log(sum(exp(xm))) - conf*xm[t] - (smoothing/C)*sum(xm)
    lse_shift = jnp.log(jnp.sum(jnp.exp(xm), axis=-1, keepdims=True))
    sum_xm = jnp.sum(xm, axis=-1, keepdims=True)

    # Gather xm[row, target[row]]: (1, C) iota broadcast vs (TILE_N, 1) targets,
    # int32 compare + select (no f32 one-hot, no (TILE_N, C) int32 temp).
    col = jax.lax.broadcasted_iota(jnp.int32, (1, c), 1)
    xm_t = jnp.sum(jnp.where(col == t, xm, 0.0), axis=-1, keepdims=True)

    confidence = 1.0 - smoothing
    loss = lse_shift - confidence * xm_t - (smoothing / c) * sum_xm

    # Drop ragged-last-block garbage rows (select, so NaN/inf never propagate).
    row = i * tile_n + jax.lax.broadcasted_iota(jnp.int32, (tn, 1), 0)
    loss = jnp.where(row < n_valid, loss, 0.0)
    block_sum = jnp.sum(loss)

    # Lane-dense, (8,128)-aligned partial-sum tile: value at [0,0], zeros
    # elsewhere, so the wrapper's jnp.sum over the output is the total sum.
    r = jax.lax.broadcasted_iota(jnp.int32, (8, 128), 0)
    l = jax.lax.broadcasted_iota(jnp.int32, (8, 128), 1)
    out_ref[...] = jnp.where((r == 0) & (l == 0), block_sum, 0.0)


def label_smoothing_cross_entropy(x, target, smoothing: float = 0.1,
                                  max_tile_n: int | None = None):
    """x: (N, C) float logits (f32 or bf16); target: (N,) int. Returns scalar f32."""
    assert smoothing < 1.0
    n, c = x.shape
    itemsize = jnp.dtype(x.dtype).itemsize

    # Row alignment: 8 sublanes for f32, 16 for bf16, 32 for 1-byte dtypes.
    row_align = max(8, 32 // itemsize)

    # ---- Byte-based, per-generation tile sizing -----------------------------
    # Per-row VMEM cost of one grid step:
    #   2 * C * itemsize        x tile, double-buffered
    #   5 * C * 4               f32/i32 compiler temps (upcast, exp, compare,
    #                           select, slack) — NOT free, especially on v7x
    #   2 * 128 * 4             (TILE_N, 1) int32 target tile, lane-padded,
    #                           double-buffered
    vmem_cap = _vmem_capacity_bytes()
    bytes_per_row = 2 * c * itemsize + 5 * c * 4 + 2 * 128 * 4
    headroom = 4 << 20
    sizing_budget = max(8 << 20, min(vmem_cap // 2, 64 << 20)) - headroom

    rows_cap = max(row_align,
                   ((sizing_budget // bytes_per_row) // row_align) * row_align)
    tile_n = min(rows_cap, _round_up(n, row_align))
    if max_tile_n is not None:
        tile_n = min(tile_n, max_tile_n)
    tile_n = max(row_align, (tile_n // row_align) * row_align)

    # Megacore (v7x has 2 TCs): make sure the "parallel" grid axis has >= 2
    # blocks when the batch allows it. Harmless on 1-TC parts.
    if n > row_align and _cdiv(n, tile_n) < 2:
        half = _round_up(_cdiv(n, 2), row_align)
        tile_n = max(row_align, min(tile_n, half))

    num_blocks = _cdiv(n, tile_n)               # ragged last block, no jnp.pad

    t = target.astype(jnp.int32).reshape(n, 1)

    # Explicit scoped-VMEM limit from the same per-tile accounting.
    vmem_need = (tile_n * bytes_per_row          # x/target buffers + f32 temps
                 + 2 * 8 * 128 * 4               # output tiles
                 + headroom)
    vmem_upper = max(32 << 20, (vmem_cap * 3) // 4)
    vmem_limit = int(min(max(vmem_need, 16 << 20), vmem_upper))

    cost = pl.CostEstimate(
        flops=6 * n * c,
        transcendentals=n * c + n,
        bytes_accessed=n * c * itemsize + n * 4 + num_blocks * 8 * 128 * 4,
    )

    kernel = functools.partial(_ls_ce_kernel, smoothing=float(smoothing),
                               n_valid=n, tile_n=tile_n)

    partials = pl.pallas_call(
        kernel,
        out_shape=jax.ShapeDtypeStruct((num_blocks * 8, 128), jnp.float32),
        grid_spec=pltpu.PrefetchScalarGridSpec(
            num_scalar_prefetch=0,
            grid=(num_blocks,),
            in_specs=[
                pl.BlockSpec((tile_n, c), lambda i: (i, 0)),
                pl.BlockSpec((tile_n, 1), lambda i: (i, 0)),
            ],
            out_specs=pl.BlockSpec((8, 128), lambda i: (i, 0)),
        ),
        compiler_params=pltpu.CompilerParams(
            dimension_semantics=("parallel",),
            vmem_limit_bytes=vmem_limit,
        ),
        cost_estimate=cost,
    )(x, t)

    return jnp.sum(partials) / jnp.float32(n)


def _reference(x, target, smoothing: float = 0.1):
    confidence = 1.0 - smoothing
    logprobs = jax.nn.log_softmax(x.astype(jnp.float32), axis=-1)
    nll = -jnp.take_along_axis(logprobs, target[:, None].astype(jnp.int32),
                               axis=-1)[:, 0]
    smooth = -jnp.mean(logprobs, axis=-1)
    return jnp.mean(confidence * nll + smoothing * smooth)


if __name__ == "__main__":
    key = jax.random.PRNGKey(0)
    k1, k2, k3, k4 = jax.random.split(key, 4)

    # Test 1: f32 logits, N not a multiple of the tile -> multi-block grid,
    # double buffering, partial (ragged) last block with no wrapper-side pad.
    n1, c1 = 20, 32
    x1 = jax.random.normal(k1, (n1, c1), dtype=jnp.float32)
    t1 = jax.random.randint(k2, (n1,), 0, c1, dtype=jnp.int32)
    out1 = jax.block_until_ready(
        label_smoothing_cross_entropy(x1, t1, smoothing=0.1, max_tile_n=8))
    ref1 = _reference(x1, t1, smoothing=0.1)
    assert jnp.allclose(out1, ref1, atol=2e-5, rtol=2e-5), (out1, ref1)

    # Test 2: bf16 logits streamed as bf16 (HBM-bound path), C not a multiple
    # of 128 (full-extent class block; Mosaic handles the lane padding).
    n2, c2 = 16, 48
    x2 = jax.random.normal(k3, (n2, c2), dtype=jnp.float32).astype(jnp.bfloat16)
    t2 = jax.random.randint(k4, (n2,), 0, c2, dtype=jnp.int32)
    out2 = jax.block_until_ready(
        label_smoothing_cross_entropy(x2, t2, smoothing=0.1))
    ref2 = _reference(x2, t2, smoothing=0.1)
    assert jnp.allclose(out2, ref2, atol=1e-4, rtol=1e-4), (out2, ref2)

    print("KERNEL_OK")
</pallas_src>

<mosaic_0001>
module attributes {stable_mosaic.version = 11 : i64} {
  func.func @_ls_ce_kernel(%arg0: i32, %arg1: memref<8x32xf32, #tpu.memory_space<vmem>>, %arg2: memref<8x1xi32, #tpu.memory_space<vmem>>, %arg3: memref<8x128xf32, #tpu.memory_space<vmem>>) attributes {dimension_semantics = [#tpu.dimension_semantics<parallel>], iteration_bounds = array<i64: 3>, scalar_prefetch = 0 : i64, scratch_operands = 0 : i64, tpu.core_type = #tpu.core_type<tc>, window_params = [{transform_indices = @transform_0, window_bounds = array<i64: 8, 32>}, {transform_indices = @transform_1, window_bounds = array<i64: 8, 1>}, {transform_indices = @transform_2, window_bounds = array<i64: 8, 128>}]} {
    %c0 = arith.constant 0 : index
    %c0_0 = arith.constant 0 : index
    %0 = vector.load %arg1[%c0, %c0_0] : memref<8x32xf32, #tpu.memory_space<vmem>>, vector<8x32xf32>
    %c0_1 = arith.constant 0 : index
    %c0_2 = arith.constant 0 : index
    %1 = vector.load %arg2[%c0_1, %c0_2] : memref<8x1xi32, #tpu.memory_space<vmem>>, vector<8x1xi32>
    %cst = arith.constant dense<0xFF800000> : vector<8xf32>
    %2 = vector.multi_reduction <maximumf>, %0, %cst [1] : vector<8x32xf32> to vector<8xf32>
    %3 = vector.shape_cast %2 : vector<8xf32> to vector<8x1xf32>
    %4 = vector.broadcast %3 : vector<8x1xf32> to vector<8x32xf32>
    %5 = arith.subf %0, %4 : vector<8x32xf32>
    %6 = math.exp %5 : vector<8x32xf32>
    %cst_3 = arith.constant dense<0.000000e+00> : vector<8xf32>
    %7 = vector.multi_reduction <add>, %6, %cst_3 [1] : vector<8x32xf32> to vector<8xf32>
    %8 = vector.shape_cast %7 : vector<8xf32> to vector<8x1xf32>
    %9 = math.log %8 : vector<8x1xf32>
    %cst_4 = arith.constant dense<0.000000e+00> : vector<8xf32>
    %10 = vector.multi_reduction <add>, %5, %cst_4 [1] : vector<8x32xf32> to vector<8xf32>
    %11 = vector.shape_cast %10 : vector<8xf32> to vector<8x1xf32>
    %12 = tpu.iota {dimensions = array<i32: 1>} : vector<1x32xi32>
    %13 = vector.broadcast %12 : vector<1x32xi32> to vector<8x32xi32>
    %14 = vector.broadcast %1 : vector<8x1xi32> to vector<8x32xi32>
    %15 = arith.cmpi eq, %13, %14 : vector<8x32xi32>
    %cst_5 = arith.constant 0.000000e+00 : f32
    %16 = vector.broadcast %cst_5 : f32 to vector<8x32xf32>
    %17 = arith.select %15, %5, %16 : vector<8x32xi1>, vector<8x32xf32>
    %cst_6 = arith.constant dense<0.000000e+00> : vector<8xf32>
    %18 = vector.multi_reduction <add>, %17, %cst_6 [1] : vector<8x32xf32> to vector<8xf32>
    %19 = vector.shape_cast %18 : vector<8xf32> to vector<8x1xf32>
    %cst_7 = arith.constant 0.899999976 : f32
    %20 = vector.broadcast %cst_7 : f32 to vector<8x1xf32>
    %21 = arith.mulf %20, %19 : vector<8x1xf32>
    %22 = arith.subf %9, %21 : vector<8x1xf32>
    %cst_8 = arith.constant 3.125000e-03 : f32
    %23 = vector.broadcast %cst_8 : f32 to vector<8x1xf32>
    %24 = arith.mulf %23, %11 : vector<8x1xf32>
    %25 = arith.subf %22, %24 : vector<8x1xf32>
    %c8_i32 = arith.constant 8 : i32
    %26 = arith.muli %arg0, %c8_i32 : i32
    %27 = tpu.iota {dimensions = array<i32: 0>} : vector<8x1xi32>
    %28 = vector.broadcast %26 : i32 to vector<8x1xi32>
    %29 = arith.addi %28, %27 : vector<8x1xi32>
    %c20_i32 = arith.constant 20 : i32
    %30 = vector.broadcast %c20_i32 : i32 to vector<8x1xi32>
    %31 = arith.cmpi slt, %29, %30 : vector<8x1xi32>
    %cst_9 = arith.constant 0.000000e+00 : f32
    %32 = vector.broadcast %cst_9 : f32 to vector<8x1xf32>
    %33 = arith.select %31, %25, %32 : vector<8x1xi1>, vector<8x1xf32>
    %34 = vector.shape_cast %33 : vector<8x1xf32> to vector<1x8x1xf32>
    %cst_10 = arith.constant dense<0.000000e+00> : vector<1xf32>
    %35 = vector.multi_reduction <add>, %34, %cst_10 [1, 2] : vector<1x8x1xf32> to vector<1xf32>
    %36 = vector.shape_cast %35 : vector<1xf32> to vector<1x1x1xf32>
    %37 = vector.extract %36[0, 0, 0] : f32 from vector<1x1x1xf32>
    %38 = tpu.iota {dimensions = array<i32: 0>} : vector<8x128xi32>
    %39 = tpu.iota {dimensions = array<i32: 1>} : vector<8x128xi32>
    %c0_i32 = arith.constant 0 : i32
    %40 = vector.broadcast %c0_i32 : i32 to vector<8x128xi32>
    %41 = arith.cmpi eq, %38, %40 : vector<8x128xi32>
    %c0_i32_11 = arith.constant 0 : i32
    %42 = vector.broadcast %c0_i32_11 : i32 to vector<8x128xi32>
    %43 = arith.cmpi eq, %39, %42 : vector<8x128xi32>
    %44 = arith.andi %41, %43 : vector<8x128xi1>
    %cst_12 = arith.constant 0.000000e+00 : f32
    %45 = vector.broadcast %37 : f32 to vector<8x128xf32>
    %46 = vector.broadcast %cst_12 : f32 to vector<8x128xf32>
    %47 = arith.select %44, %45, %46 : vector<8x128xi1>, vector<8x128xf32>
    %c0_13 = arith.constant 0 : index
    %c0_14 = arith.constant 0 : index
    %48 = vector.load %arg3[%c0_13, %c0_14] : memref<8x128xf32, #tpu.memory_space<vmem>>, vector<8x128xf32>
    tpu.vector_store %arg3[%c0_13, %c0_14], %47 {strides = array<i32>} : memref<8x128xf32, #tpu.memory_space<vmem>>, vector<8x128xf32>,
    return
  }
  func.func @transform_0(%arg0: i32) -> (i32, i32) {
    %c0_i32 = arith.constant 0 : i32
    %c0_i32_0 = arith.constant 0 : i32
    return %arg0, %c0_i32 : i32, i32
  }
  func.func @transform_1(%arg0: i32) -> (i32, i32) {
    %c0_i32 = arith.constant 0 : i32
    %c0_i32_0 = arith.constant 0 : i32
    return %arg0, %c0_i32 : i32, i32
  }
  func.func @transform_2(%arg0: i32) -> (i32, i32) {
    %c0_i32 = arith.constant 0 : i32
    %c0_i32_0 = arith.constant 0 : i32
    return %arg0, %c0_i32 : i32, i32
  }
}

</mosaic_0001>

<llo_original>
// kernel: tpu_custom_call.1
$region0: #{tpu_custom_call.1}
  #allocation0 [shape = 'u32[]', space=smem, size = 0x4, offset = 0x4, fixed_abs, tag = 'smem constant byte address 0x4 - core index']
  #allocation1 [shape = 'u32[144,128]{1,0:T(1,128)}', space=vmem, size = 0x12000, scoped, tag = 'internal scratch']
  %s0 = inlined_call_operand.vmem [shape: f32[20,32], index: 0, kind: input, shape index: {}]
  %s1 = inlined_call_operand.vmem [shape: s32[20,1], index: 1, kind: input, shape index: {}]
  %s2 = inlined_call_operand.hbm [shape: f32[24,128], index: 2, kind: output, shape index: {}]
  %s3 = sld [smem:[#allocation0]]
  $region41: #{tpu_custom_call.1} parent=0
    _
  %s5 = ssub.s32 1, %s3
  %s6 = scalar_select 0, %s5, %s3
  $region1: #{tpu_custom_call.1} parent=0
    #allocation2 [shape = 'u8[8192]{0}', space=vmem, size = 0x2000, scoped, tag = 'output window, operand 0']
    #allocation3 [shape = 's32[2]{0}', space=sflag, size = 0x8, scoped, tag = 'scoped memory for tpu_custom_call.1']
    %7 = vsyncpa [#allocation3], 0
    %s8 = scalar_lea.sflag [#allocation3], 1
    %9 = vsyncpa %s8, 0
    loop: start=0, step=1, limit=5
    $region2: #{tpu_custom_call.1} parent=1 // loop_pre_header
      _
    $region3: #{tpu_custom_call.1} parent=1 // loop_header
      %s11 = sphi 0, %s15
      %p12 = scmp.ge.s32.totalorder %s11, 5
      %s21 = sphi 0, %s23
      %s24 = sphi 0, %s21
      %s25 = sphi 0, %s24
      %s41 = sphi 0, %s25
      %s47 = sphi 0, %s49
      %s50 = sphi 0, %s47
      %s51 = sphi 0, %s50
      %s67 = sphi 0, %s51
      %s73 = sphi 0, %s75
      %s76 = sphi 0, %s73
      %s77 = sphi 0, %s76
      %s93 = sphi 0, %s77
    $region4: #{tpu_custom_call.1} parent=1 // loop_header_branch
      %14 = sbr.rel (%p12) target = $region8
    $region5: #{tpu_custom_call.1} parent=1 // loop_body
      %s16 = ssub.s32 %s11, 1
      %s17 = ssub.s32 %s11, 2
      %s18 = sadd.s32 %s11, 1
      %s19 = ssub.s32 %s11, %s18
      %p20 = scmp.eq.s32.totalorder %s19, 0
      %s22 = sadd.s32 %s21, 1
      %s23 = scalar_select %p20, %s21, %s22
      %p26 = pneg %p20
      %p27 = scmp.eq.s32.totalorder %s11, 2
      %p28 = por %p26, %p27
      %p29 = scmp.ne.s32.totalorder %s21, %s24
      %p30 = scmp.eq.s32.totalorder %s11, 0
      %p31 = por %p29, %p30
      %p32 = scmp.ne.s32.totalorder %s21, %s24
      %p33 = scmp.eq.s32.totalorder %s16, 2
      %p34 = por %p32, %p33
      %p35 = scmp.ne.s32.totalorder %s24, %s25
      %p36 = scmp.eq.s32.totalorder %s16, 0
      %p37 = por %p35, %p36
      %p38 = scmp.ne.s32.totalorder %s24, %s25
      %p39 = scmp.eq.s32.totalorder %s17, 2
      %p40 = por %p38, %p39
      %p42 = scmp.ne.s32.totalorder %s25, %s41
      %p43 = scmp.eq.s32.totalorder %s17, 0
      %p44 = por %p42, %p43
      %s45 = ssub.s32 %s11, %s18
      %p46 = scmp.eq.s32.totalorder %s45, 0
      %s48 = sadd.s32 %s47, 1
      %s49 = scalar_select %p46, %s47, %s48
      %p52 = pneg %p46
      %p53 = scmp.eq.s32.totalorder %s11, 2
      %p54 = por %p52, %p53
      %p55 = scmp.ne.s32.totalorder %s47, %s50
      %p56 = scmp.eq.s32.totalorder %s11, 0
      %p57 = por %p55, %p56
      %p58 = scmp.ne.s32.totalorder %s47, %s50
      %p59 = scmp.eq.s32.totalorder %s16, 2
      %p60 = por %p58, %p59
      %p61 = scmp.ne.s32.totalorder %s50, %s51
      %p62 = scmp.eq.s32.totalorder %s16, 0
      %p63 = por %p61, %p62
      %p64 = scmp.ne.s32.totalorder %s50, %s51
      %p65 = scmp.eq.s32.totalorder %s17, 2
      %p66 = por %p64, %p65
      %p68 = scmp.ne.s32.totalorder %s51, %s67
      %p69 = scmp.eq.s32.totalorder %s17, 0
      %p70 = por %p68, %p69
      %s71 = ssub.s32 %s11, %s18
      %p72 = scmp.eq.s32.totalorder %s71, 0
      %s74 = sadd.s32 %s73, 1
      %s75 = scalar_select %p72, %s73, %s74
      %p78 = pneg %p72
      %p79 = scmp.eq.s32.totalorder %s11, 2
      %p80 = por %p78, %p79
      %p81 = scmp.ne.s32.totalorder %s73, %s76
      %p82 = scmp.eq.s32.totalorder %s11, 0
      %p83 = por %p81, %p82
      %p84 = scmp.ne.s32.totalorder %s73, %s76
      %p85 = scmp.eq.s32.totalorder %s16, 2
      %p86 = por %p84, %p85
      %p87 = scmp.ne.s32.totalorder %s76, %s77
      %p88 = scmp.eq.s32.totalorder %s16, 0
      %p89 = por %p87, %p88
      %p90 = scmp.ne.s32.totalorder %s76, %s77
      %p91 = scmp.eq.s32.totalorder %s17, 2
      %p92 = por %p90, %p91
      %p94 = scmp.ne.s32.totalorder %s77, %s93
      %p95 = scmp.eq.s32.totalorder %s17, 0
      %p96 = por %p94, %p95
      %p97 = scmp.le.s32.totalorder 1, %s11
      %p98 = scmp.lt.s32.totalorder %s11, 4
      %p99 = pnand %p97, %p98
      %p100 = pneg %p99
      // Predicated region
      $region9: #{tpu_custom_call.1} parent=5 // pred_check
        _
      $region10: #{tpu_custom_call.1} parent=5 // pred_check_branch
        %102 = sbr.rel (%p99) target = $region12
      $region11: #{tpu_custom_call.1} parent=5 // pred_region
        %s103 = ssub.s32 %s11, 1
      $region12: #{tpu_custom_call.1} parent=5 // pred_fallthru
        _
      %p104 = scmp.lt.s32.totalorder %s11, 3
      // Predicated region
      $region13: #{tpu_custom_call.1} parent=5 // pred_check
        %p105 = pneg %p104
      $region14: #{tpu_custom_call.1} parent=5 // pred_check_branch
        %107 = sbr.rel (%p105) target = $region16
      $region15: #{tpu_custom_call.1} parent=5 // pred_region
        // Predicated region
        $region17: #{tpu_custom_call.1} parent=15 // pred_check
          %p108 = pneg %p31
        $region18: #{tpu_custom_call.1} parent=15 // pred_check_branch
          %110 = sbr.rel (%p108) target = $region20
        $region19: #{tpu_custom_call.1} parent=15 // pred_region
          %p111 = scmp.lt.s32.totalorder %s11, 2
          %s112 = scalar_select %p111, %s11, 2
          %s113 = smul.addr %s112, 8
          %s114 = scalar_lea.vmem %s0, %s113
        $region20: #{tpu_custom_call.1} parent=15 // pred_fallthru
          _
        // Predicated region
        $region21: #{tpu_custom_call.1} parent=15 // pred_check
          %p115 = pneg %p57
        $region22: #{tpu_custom_call.1} parent=15 // pred_check_branch
          %117 = sbr.rel (%p115) target = $region24
        $region23: #{tpu_custom_call.1} parent=15 // pred_region
          %p118 = scmp.lt.s32.totalorder %s11, 2
          %s119 = scalar_select %p118, %s11, 2
          %s120 = smul.addr %s119, 8
          %s121 = scalar_lea.vmem %s1, %s120
        $region24: #{tpu_custom_call.1} parent=15 // pred_fallthru
          _
      $region16: #{tpu_custom_call.1} parent=5 // pred_fallthru
        _
      %p122 = scmp.le.s32.totalorder 1, %s11
      %p123 = scmp.lt.s32.totalorder %s11, 4
      %p124 = pnand %p122, %p123
      %p125 = pneg %p124
      // Predicated region
      $region25: #{tpu_custom_call.1} parent=5 // pred_check
        _
      $region26: #{tpu_custom_call.1} parent=5 // pred_check_branch
        %127 = sbr.rel (%p124) target = $region28
      $region27: #{tpu_custom_call.1} parent=5 // pred_region
        %s128 = ssub.s32 %s11, 1
        %p129 = scmp.lt.s32.totalorder %s16, 2
        %s130 = scalar_select %p129, %s16, 2
        %s131 = smul.addr %s130, 8
        %s132 = scalar_lea.vmem %s0, %s131
        %p133 = pneg %p37
        %p134 = pneg %p34
        %p135 = scmp.lt.s32.totalorder %s16, 2
        %s136 = scalar_select %p135, %s16, 2
        %s137 = smul.addr %s136, 8
        %s138 = scalar_lea.vmem %s1, %s137
        %p139 = pneg %p63
        %p140 = pneg %p60
        %p141 = pneg %p89
        %p142 = pneg %p86
        %s143 = sand.u32 %s76, 1
        %s144 = scalar_lea.sflag [#allocation3], %s143
        %s145 = sand.u32 %s76, 1
        %s146 = smul.addr %s145, 8
        %s147 = scalar_lea.vmem [#allocation2], %s146
        %p148 = scmp.lt.s32.totalorder %s16, 2
        %s149 = scalar_select %p148, %s16, 2
        %s150 = smul.addr %s149, 8
        %s151 = scalar_lea.vmem %s0, %s150
        %p152 = scmp.lt.s32.totalorder %s16, 2
        %s153 = scalar_select %p152, %s16, 2
        %s154 = smul.addr %s153, 8
        %s155 = scalar_lea.vmem %s1, %s154
        %v156 = vld [vmem:[%s151] sm:$0xff]
        %v157 = vld [vmem:[%s155] sm:$0xff]
        %vm158 = vcmask 261120
        %v159 = vsel %vm158, %v156, -inf
        %160 = vmax.xlane.f32.xlu0 %v159
        %v161 = vpop.xlane.xlu0 %160
        %v162 = vsub.f32 %v156, %v161
        %v163 = vmul.f32 %v162, 1.442695
        %v164 = vpow.pop %v163
        %v165 = vsel %vm158, %v164, 0.0
        %166 = vadd.xlane.f32.xlu0 %v165
        %v167 = vpop.xlane.xlu0 %166
        %v168 = vlog2.pop %v167
        %v169 = vmul.f32 %v168, 0.6931472
        %v170 = vsel %vm158, %v162, 0.0
        %171 = vadd.xlane.f32.xlu0 %v170
        %v172 = vpop.xlane.xlu0 %171
        %v173 = vlaneseq
        %v174 = vand.u32 %v173, 127
        %175 = vset.pattern.permute.xlu0 0
        %176 = vperm.xlu0 %175, %v157
        %v177 = vpop.permute.xlu0 %176
        %vm178 = vcmp.eq.s32.totalorder %v174, %v177
        %v179 = vsel %vm178, %v162, 0.0
        %v180 = vsel %vm158, %v179, 0.0
        %181 = vadd.xlane.f32.xlu0 %v180
        %v182 = vpop.xlane.xlu0 %181
        %v183 = vmul.f32 %v182, 0.9
        %v184 = vsub.f32 %v169, %v183
        %v185 = vmul.f32 %v172, 0.003125
        %v186 = vsub.f32 %v184, %v185
        %s187 = smul.u32 %s16, 8
        %v188 = vlaneseq
        %v189 = vshrl.u32 %v188, 7
        %v190 = vstv %s187
        %v191 = vadd.s32 %v190, %v189
        %vm192 = vcmp.lt.s32.totalorder %v191, 20
        %v193 = vsel %vm192, %v186, 0.0
        %vm194 = vcmask 7168
        %v195 = vsel %vm194, %v193, 0.0
        %196 = vadd.xlane.f32.xlu0 %v195
        %v197 = vpop.xlane.xlu0 %196
        %v198 = vrot.slane %v197, 4
        %v199 = vadd.f32 %v197, %v198
        %v200 = vrot.slane %v199, 2
        %v201 = vadd.f32 %v199, %v200
        %v202 = vrot.slane %v201, 1
        %v203 = vadd.f32 %v201, %v202
        %s204 = vtos %v203
        %vm205 = vcmp.eq.s32.totalorder %v189, 0
        %vm206 = vcmp.eq.s32.totalorder %v174, 0
        %vm207 = vmand %vm205, %vm206
        %v208 = vstv %s204
        %v209 = vsel %vm207, %v208, 0.0
        %210 = vst [vmem:[%s147] sm:$0xff] %v209
        %s211 = sand.u32 %s76, 1
        %s212 = scalar_lea.sflag [#allocation3], %s211
        %s213 = sand.u32 %s76, 1
        %s214 = smul.addr %s213, 8
        %s215 = scalar_lea.vmem [#allocation2], %s214
        // Predicated region
        $region29: #{tpu_custom_call.1} parent=27 // pred_check
          %p216 = pneg %p86
        $region30: #{tpu_custom_call.1} parent=27 // pred_check_branch
          %218 = sbr.rel (%p216) target = $region32
        $region31: #{tpu_custom_call.1} parent=27 // pred_region
          %s220 = ssub.s32 128, 128
          %221 = vsyncadd %s212, %s220
          %s222 = smul.addr %s16, 128
          %s223 = scalar_lea.hbm %s2, %s222
          %s225 = sshll.u32 %s215, 4
          %s226 = int_to_ptr.vmem [resolvable:$true] %s225
          %228 = dma.vmem_to_hbm [thread:$0]  %s226, 128, %s223, %s212
        $region32: #{tpu_custom_call.1} parent=27 // pred_fallthru
          _
      $region28: #{tpu_custom_call.1} parent=5 // pred_fallthru
        _
      %p229 = scmp.le.s32.totalorder 2, %s11
      // Predicated region
      $region33: #{tpu_custom_call.1} parent=5 // pred_check
        %p230 = pneg %p229
      $region34: #{tpu_custom_call.1} parent=5 // pred_check_branch
        %232 = sbr.rel (%p230) target = $region36
      $region35: #{tpu_custom_call.1} parent=5 // pred_region
        %s233 = ssub.s32 %s11, 2
        // Predicated region
        $region37: #{tpu_custom_call.1} parent=35 // pred_check
          %p234 = pneg %p92
        $region38: #{tpu_custom_call.1} parent=35 // pred_check_branch
          %236 = sbr.rel (%p234) target = $region40
        $region39: #{tpu_custom_call.1} parent=35 // pred_region
          %s237 = sand.u32 %s77, 1
          %s238 = scalar_lea.sflag [#allocation3], %s237
          %s239 = sand.u32 %s77, 1
          %s240 = smul.addr %s239, 8
          %s241 = scalar_lea.vmem [#allocation2], %s240
          %242 = dma.done %s238, 128
        $region40: #{tpu_custom_call.1} parent=35 // pred_fallthru
          _
      $region36: #{tpu_custom_call.1} parent=5 // pred_fallthru
        _
    $region6: #{tpu_custom_call.1} parent=1 // loop_footer
      %s15 = sadd.s32 1, %s11
    $region7: #{tpu_custom_call.1} parent=1 // loop_footer_branch
      %10 = sbr.rel target = $region3
    $region8: #{tpu_custom_call.1} parent=1 // loop_exit
      _
    %243 = vsyncpa [#allocation3], 1
    %s244 = scalar_lea.sflag [#allocation3], 1
    %245 = vsyncpa %s244, 1

</llo_original>
